<compile_context>
chip_gen: v7x
topology: tpu7x:2x2x1
jax: 0.10.0
libtpu: 0.0.40
codegen_flags: <defaults>
</compile_context>

<pallas_src>
import math
import jax
import jax.numpy as jnp
from jax.experimental import pallas as pl
from jax.experimental.pallas import tpu as pltpu


def _round_up(n, m):
    return ((n + m - 1) // m) * m


def _sublane(dtype):
    """Minimum second-minor tile multiple for this dtype (8 f32 / 16 bf16 / 32 i8)."""
    return max(8, 32 // jnp.dtype(dtype).itemsize)


def _pick_tf(d_ff, target=512):
    """Pick a lane/MXU-aligned d_ff tile and the (possibly padded) d_ff.

    Prefers 256-aligned tiles (v6e/v7x MXUs are 2x256^2); pads d_ff with zero
    gate columns when no aligned divisor exists (exact: SiLU(0)*0 == 0)."""
    if d_ff <= 128:
        return 128, 128
    # Largest 256-aligned divisor of d_ff that is <= target.
    t = min(target - target % 256, d_ff - d_ff % 256)
    while t >= 256:
        if d_ff % t == 0:
            return t, d_ff
        t -= 256
    # Fall back to a 128-aligned divisor.
    t = min(target - target % 128, d_ff - d_ff % 128)
    while t >= 128:
        if d_ff % t == 0:
            return t, d_ff
        t -= 128
    # No aligned divisor: pad d_ff.
    t = 256 if d_ff >= 256 else 128
    return t, _round_up(d_ff, t)


def _hw_config():
    """Generation-aware defaults: (tm_target, vmem_limit_bytes, two_tensorcores)."""
    mib = 1024 * 1024
    vmem_cap = None
    try:
        info = pltpu.get_tpu_info()
        vmem_cap = int(getattr(info, "vmem_capacity_bytes"))
    except Exception:
        vmem_cap = None
    kind = ""
    try:
        kind = jax.devices()[0].device_kind.lower()
    except Exception:
        kind = ""
    if vmem_cap is None:
        vmem_cap = 64 * mib if "v7" in kind else 128 * mib

    if vmem_cap <= 80 * mib or "v7" in kind:
        # v7x-class: 64 MiB VMEM per TensorCore, 2 TCs/chip -> keep >=2 row tiles.
        limit = min(56 * mib, max(vmem_cap - 8 * mib, 32 * mib))
        return 512, limit, True
    limit = min(100 * mib, vmem_cap - 16 * mib)
    if "v5" in kind and "v5p" not in kind:
        # v5e: lowest HBM BW, but ~240 FLOPs/byte suffices -> tm ~ 512 is plenty.
        return 512, limit, False
    # v6e / v5p / unknown 128 MiB parts.
    return 1024, limit, ("v4" in kind or "v5p" in kind)


def swiglu_kernel(x_ref, w13t_ref, w2t_ref, o_ref, acc_ref):
    # x_ref:    (tm, d_model)    block (i, 0)  -> resident across j (no re-DMA)
    # w13t_ref: (d_model, 2*tf)  block (0, j)  -> [W1^T tile j | W3^T tile j]
    # w2t_ref:  (tf, d_model)    block (j, 0)
    # o_ref:    (tm, d_model)    block (i, 0)  -> resident across j
    # acc_ref:  (tm, d_model)    f32 VMEM scratch accumulator
    j = pl.program_id(1)
    tf = w2t_ref.shape[0]

    # Single fused gate matmul: one MXU pass covers both W1 and W3 projections.
    ab = jnp.dot(x_ref[...], w13t_ref[...], preferred_element_type=jnp.float32)
    a = ab[:, :tf]
    b = ab[:, tf:]
    h = (a * jax.nn.sigmoid(a)) * b            # SiLU(a) * b in f32 (VPU/EUP slots)
    partial = jnp.dot(h.astype(w2t_ref.dtype), w2t_ref[...],
                      preferred_element_type=jnp.float32)

    # First reduction step writes directly -- no zero-fill + read-add pass.
    @pl.when(j == 0)
    def _():
        acc_ref[...] = partial

    @pl.when(j > 0)
    def _():
        acc_ref[...] += partial

    @pl.when(j == pl.num_programs(1) - 1)
    def _():
        o_ref[...] = acc_ref[...].astype(o_ref.dtype)


def prepare_swiglu_weights(w1, w3, w2, *, tf_target=512):
    """One-time weight preparation (hoisted out of the forward hot path).

    w1, w3: (d_ff, d_model); w2: (d_model, d_ff)   [nn.Linear layout]
    Returns (w13t, w2t, tf):
      w13t: (d_model, n_tf * 2*tf) -- per-d_ff-tile interleaved [W1^T_j | W3^T_j]
      w2t:  (d_ff_pad, d_model)    -- W2^T with zero-padded rows
    """
    d_ff, d_model = w1.shape
    tf, d_ff_pad = _pick_tf(d_ff, tf_target)
    pad = d_ff_pad - d_ff
    w1t = jnp.pad(w1, ((0, pad), (0, 0))).T        # (d_model, d_ff_pad)
    w3t = jnp.pad(w3, ((0, pad), (0, 0))).T        # (d_model, d_ff_pad)
    w2t = jnp.pad(w2, ((0, 0), (0, pad))).T        # (d_ff_pad, d_model)
    n_tf = d_ff_pad // tf
    w1b = w1t.reshape(d_model, n_tf, tf)
    w3b = w3t.reshape(d_model, n_tf, tf)
    w13t = jnp.concatenate([w1b, w3b], axis=-1).reshape(d_model, n_tf * 2 * tf)
    return w13t, w2t, tf


def swiglu_forward(x, w13t, w2t, tf, *, tm=None, vmem_limit_bytes=None):
    """x: [..., d_model]; (w13t, w2t, tf) from prepare_swiglu_weights."""
    orig_shape = x.shape
    d_model = orig_shape[-1]
    d_ff_pad = w2t.shape[0]
    assert d_ff_pad % tf == 0
    n_tf = d_ff_pad // tf
    assert w13t.shape == (d_model, n_tf * 2 * tf)

    xm = x.reshape(-1, d_model)
    M = xm.shape[0]

    tm_target, vmem_default, two_tc = _hw_config()
    if tm is None:
        tm = tm_target
    if vmem_limit_bytes is None:
        vmem_limit_bytes = vmem_default

    sub = _sublane(x.dtype)
    rows = _round_up(M, sub)
    tm = max(sub, min(_round_up(tm, sub), rows))
    # On 2-TensorCore parts keep >= 2 row tiles so the parallel axis uses both.
    if two_tc and rows >= 2 * sub and tm >= rows:
        tm = _round_up(max(rows // 2, sub), sub)

    # Shrink tm until the (double-buffered) footprint fits the VMEM budget.
    xs = jnp.dtype(x.dtype).itemsize
    ws = jnp.dtype(w13t.dtype).itemsize

    def footprint(tm_):
        return (2 * tm_ * d_model * xs          # x block (double-buffered)
                + 2 * tm_ * d_model * xs        # out block (double-buffered)
                + 2 * d_model * 2 * tf * ws     # W13^T tile (double-buffered)
                + 2 * tf * d_model * ws         # W2^T tile  (double-buffered)
                + tm_ * d_model * 4)            # f32 accumulator

    while tm > sub and footprint(tm) > 0.9 * vmem_limit_bytes:
        tm = max(sub, _round_up(tm // 2, sub))

    M_pad = _round_up(M, tm)
    if M_pad != M:
        xm = jnp.pad(xm, ((0, M_pad - M), (0, 0)))

    grid = (M_pad // tm, n_tf)                  # reduction (d_ff) axis last
    n_row_tiles = grid[0]

    cost = pl.CostEstimate(
        flops=int(6 * M_pad * d_model * d_ff_pad),
        transcendentals=int(M_pad * d_ff_pad),
        bytes_accessed=int(2 * M_pad * d_model * xs
                           + (w13t.size + w2t.size) * ws * n_row_tiles),
    )

    out = pl.pallas_call(
        swiglu_kernel,
        out_shape=jax.ShapeDtypeStruct((M_pad, d_model), x.dtype),
        grid_spec=pltpu.PrefetchScalarGridSpec(
            num_scalar_prefetch=0,
            grid=grid,
            in_specs=[
                pl.BlockSpec((tm, d_model), lambda i, j: (i, 0)),
                pl.BlockSpec((d_model, 2 * tf), lambda i, j: (0, j)),
                pl.BlockSpec((tf, d_model), lambda i, j: (j, 0)),
            ],
            out_specs=pl.BlockSpec((tm, d_model), lambda i, j: (i, 0)),
            scratch_shapes=[pltpu.VMEM((tm, d_model), jnp.float32)],
        ),
        compiler_params=pltpu.CompilerParams(
            dimension_semantics=("parallel", "arbitrary"),
            vmem_limit_bytes=int(vmem_limit_bytes)),
        cost_estimate=cost,
    )(xm, w13t, w2t)

    if M_pad != M:
        out = out[:M]
    return out.reshape(orig_shape)


def _init_linear_weight(key, out_features, in_features, dtype=jnp.float32):
    # Matches nn.init.trunc_normal_(mean=0, std=std, a=-3*std, b=3*std)
    std = math.sqrt(2.0 / (in_features + out_features))
    w = jax.random.truncated_normal(key, -3.0, 3.0,
                                    (out_features, in_features), jnp.float32) * std
    return w.astype(dtype)


def _reference(x, w1, w3, w2):
    a = jnp.einsum("...d,fd->...f", x, w1)
    b = jnp.einsum("...d,fd->...f", x, w3)
    return jnp.einsum("...f,df->...d", (a * jax.nn.sigmoid(a)) * b, w2)


if __name__ == "__main__":
    key = jax.random.PRNGKey(0)
    kx, k1, k2, k3, kx2, kx3, kw1, kw2, kw3 = jax.random.split(key, 9)

    # ---- Case 1: toy shapes; exercises the d_ff padding path (64 -> 128) ----
    d_model, d_ff = 32, 64
    batch, seq = 2, 8
    x = jax.random.normal(kx, (batch, seq, d_model), dtype=jnp.float32)
    w1 = _init_linear_weight(k1, d_ff, d_model)   # (d_ff, d_model)
    w3 = _init_linear_weight(k3, d_ff, d_model)   # (d_ff, d_model)
    w2 = _init_linear_weight(k2, d_model, d_ff)   # (d_model, d_ff)

    # One-time weight prep (transpose + fuse W1/W3 + pad d_ff), out of hot path.
    w13t, w2t, tf = prepare_swiglu_weights(w1, w3, w2)

    out = swiglu_forward(x, w13t, w2t, tf)
    jax.block_until_ready(out)
    assert out.shape == x.shape
    assert jnp.allclose(out, _reference(x, w1, w3, w2), atol=1e-5, rtol=1e-5)

    # ---- Case 2: remainder rows (M = 39, not a sublane/tile multiple) ----
    x2 = jax.random.normal(kx2, (3, 13, d_model), dtype=jnp.float32)
    out2 = swiglu_forward(x2, w13t, w2t, tf)
    jax.block_until_ready(out2)
    assert jnp.allclose(out2, _reference(x2, w1, w3, w2), atol=1e-5, rtol=1e-5)

    # ---- Case 3: multi-tile d_ff reduction (j-grid = 2), accumulator path ----
    d_model3, d_ff3 = 128, 512
    x3 = jax.random.normal(kx3, (2, 8, d_model3), dtype=jnp.float32)
    w1b = _init_linear_weight(kw1, d_ff3, d_model3)
    w3b = _init_linear_weight(kw3, d_ff3, d_model3)
    w2b = _init_linear_weight(kw2, d_model3, d_ff3)
    w13t3, w2t3, tf3 = prepare_swiglu_weights(w1b, w3b, w2b, tf_target=256)
    out3 = swiglu_forward(x3, w13t3, w2t3, tf3)
    jax.block_until_ready(out3)
    assert jnp.allclose(out3, _reference(x3, w1b, w3b, w2b), atol=1e-4, rtol=1e-4)

    # ---- Case 4: bf16 production path (f32 accumulation inside the kernel) ----
    xb = x3.astype(jnp.bfloat16)
    w13t4, w2t4, tf4 = prepare_swiglu_weights(
        w1b.astype(jnp.bfloat16), w3b.astype(jnp.bfloat16),
        w2b.astype(jnp.bfloat16), tf_target=256)
    outb = swiglu_forward(xb, w13t4, w2t4, tf4)
    jax.block_until_ready(outb)
    refb = _reference(xb.astype(jnp.float32),
                      w1b.astype(jnp.bfloat16).astype(jnp.float32),
                      w3b.astype(jnp.bfloat16).astype(jnp.float32),
                      w2b.astype(jnp.bfloat16).astype(jnp.float32))
    assert outb.dtype == jnp.bfloat16
    assert jnp.allclose(outb.astype(jnp.float32), refb, atol=5e-2, rtol=5e-2)

    print("KERNEL_OK")
</pallas_src>

<mosaic_0001>
module attributes {stable_mosaic.version = 11 : i64} {
  func.func @swiglu_kernel(%arg0: i32, %arg1: i32, %arg2: memref<16x32xf32, #tpu.memory_space<vmem>>, %arg3: memref<32x256xf32, #tpu.memory_space<vmem>>, %arg4: memref<128x32xf32, #tpu.memory_space<vmem>>, %arg5: memref<16x32xf32, #tpu.memory_space<vmem>>, %arg6: memref<16x32xf32, #tpu.memory_space<vmem>>) attributes {dimension_semantics = [#tpu.dimension_semantics<parallel>, #tpu.dimension_semantics<arbitrary>], iteration_bounds = array<i64: 1, 1>, scalar_prefetch = 0 : i64, scratch_operands = 1 : i64, tpu.core_type = #tpu.core_type<tc>, window_params = [{transform_indices = @transform_0, window_bounds = array<i64: 16, 32>}, {transform_indices = @transform_1, window_bounds = array<i64: 32, 256>}, {transform_indices = @transform_2, window_bounds = array<i64: 128, 32>}, {transform_indices = @transform_3, window_bounds = array<i64: 16, 32>}]} {
    %c0 = arith.constant 0 : index
    %c0_0 = arith.constant 0 : index
    %0 = vector.load %arg2[%c0, %c0_0] : memref<16x32xf32, #tpu.memory_space<vmem>>, vector<16x32xf32>
    %c0_1 = arith.constant 0 : index
    %c0_2 = arith.constant 0 : index
    %1 = vector.load %arg3[%c0_1, %c0_2] : memref<32x256xf32, #tpu.memory_space<vmem>>, vector<32x256xf32>
    %cst = arith.constant dense<0.000000e+00> : vector<16x256xf32>
    %2 = tpu.matmul %0, %1, %cst {dimension_numbers = #tpu.dot_dimension_numbers<[1], [0], [0], [1], [0, 0, 1, 1], [], []>} : vector<16x32xf32>, vector<32x256xf32>, vector<16x256xf32> -> vector<16x256xf32>
    %3 = vector.extract_strided_slice %2 {offsets = [0, 0], sizes = [16, 128], strides = [1, 1]} : vector<16x256xf32> to vector<16x128xf32>
    %4 = vector.extract_strided_slice %2 {offsets = [0, 128], sizes = [16, 128], strides = [1, 1]} : vector<16x256xf32> to vector<16x128xf32>
    %5 = arith.negf %3 : vector<16x128xf32>
    %6 = math.exp %5 : vector<16x128xf32>
    %cst_3 = arith.constant 1.000000e+00 : f32
    %7 = vector.broadcast %cst_3 : f32 to vector<16x128xf32>
    %8 = arith.addf %7, %6 : vector<16x128xf32>
    %9 = arith.divf %7, %8 : vector<16x128xf32>
    %10 = arith.mulf %3, %9 : vector<16x128xf32>
    %11 = arith.mulf %10, %4 : vector<16x128xf32>
    %c0_4 = arith.constant 0 : index
    %c0_5 = arith.constant 0 : index
    %12 = vector.load %arg4[%c0_4, %c0_5] : memref<128x32xf32, #tpu.memory_space<vmem>>, vector<128x32xf32>
    %cst_6 = arith.constant dense<0.000000e+00> : vector<16x32xf32>
    %13 = tpu.matmul %11, %12, %cst_6 {dimension_numbers = #tpu.dot_dimension_numbers<[1], [0], [0], [1], [0, 0, 1, 1], [], []>} : vector<16x128xf32>, vector<128x32xf32>, vector<16x32xf32> -> vector<16x32xf32>
    %c0_i32 = arith.constant 0 : i32
    %14 = arith.cmpi eq, %arg1, %c0_i32 : i32
    %15 = arith.extui %14 : i1 to i32
    %c0_i32_7 = arith.constant 0 : i32
    %16 = arith.cmpi ne, %15, %c0_i32_7 : i32
    scf.if %16 {
      %c0_12 = arith.constant 0 : index
      %c0_13 = arith.constant 0 : index
      %23 = vector.load %arg6[%c0_12, %c0_13] : memref<16x32xf32, #tpu.memory_space<vmem>>, vector<16x32xf32>
      tpu.vector_store %arg6[%c0_12, %c0_13], %13 {strides = array<i32>} : memref<16x32xf32, #tpu.memory_space<vmem>>, vector<16x32xf32>,
    } else {
    }
    %c0_i32_8 = arith.constant 0 : i32
    %17 = arith.cmpi sgt, %arg1, %c0_i32_8 : i32
    %18 = arith.extui %17 : i1 to i32
    %c0_i32_9 = arith.constant 0 : i32
    %19 = arith.cmpi ne, %18, %c0_i32_9 : i32
    scf.if %19 {
      %c0_12 = arith.constant 0 : index
      %c0_13 = arith.constant 0 : index
      %23 = vector.load %arg6[%c0_12, %c0_13] : memref<16x32xf32, #tpu.memory_space<vmem>>, vector<16x32xf32>
      %24 = arith.addf %23, %13 : vector<16x32xf32>
      %c0_14 = arith.constant 0 : index
      %c0_15 = arith.constant 0 : index
      %25 = vector.load %arg6[%c0_14, %c0_15] : memref<16x32xf32, #tpu.memory_space<vmem>>, vector<16x32xf32>
      tpu.vector_store %arg6[%c0_14, %c0_15], %24 {strides = array<i32>} : memref<16x32xf32, #tpu.memory_space<vmem>>, vector<16x32xf32>,
    } else {
    }
    %c0_i32_10 = arith.constant 0 : i32
    %20 = arith.cmpi eq, %arg1, %c0_i32_10 : i32
    %21 = arith.extui %20 : i1 to i32
    %c0_i32_11 = arith.constant 0 : i32
    %22 = arith.cmpi ne, %21, %c0_i32_11 : i32
    scf.if %22 {
      %c0_12 = arith.constant 0 : index
      %c0_13 = arith.constant 0 : index
      %23 = vector.load %arg6[%c0_12, %c0_13] : memref<16x32xf32, #tpu.memory_space<vmem>>, vector<16x32xf32>
      %c0_14 = arith.constant 0 : index
      %c0_15 = arith.constant 0 : index
      %24 = vector.load %arg5[%c0_14, %c0_15] : memref<16x32xf32, #tpu.memory_space<vmem>>, vector<16x32xf32>
      tpu.vector_store %arg5[%c0_14, %c0_15], %23 {strides = array<i32>} : memref<16x32xf32, #tpu.memory_space<vmem>>, vector<16x32xf32>,
    } else {
    }
    return
  }
  func.func @transform_0(%arg0: i32, %arg1: i32) -> (i32, i32) {
    %c0_i32 = arith.constant 0 : i32
    %c0_i32_0 = arith.constant 0 : i32
    return %arg0, %c0_i32 : i32, i32
  }
  func.func @transform_1(%arg0: i32, %arg1: i32) -> (i32, i32) {
    %c0_i32 = arith.constant 0 : i32
    %c0_i32_0 = arith.constant 0 : i32
    return %c0_i32, %arg1 : i32, i32
  }
  func.func @transform_2(%arg0: i32, %arg1: i32) -> (i32, i32) {
    %c0_i32 = arith.constant 0 : i32
    %c0_i32_0 = arith.constant 0 : i32
    return %arg1, %c0_i32 : i32, i32
  }
  func.func @transform_3(%arg0: i32, %arg1: i32) -> (i32, i32) {
    %c0_i32 = arith.constant 0 : i32
    %c0_i32_0 = arith.constant 0 : i32
    return %arg0, %c0_i32 : i32, i32
  }
}

</mosaic_0001>

<llo_original>
// kernel: tpu_custom_call.1
$region0: #{tpu_custom_call.1}
  #allocation0 [shape = 'u32[]', space=smem, size = 0x4, offset = 0x4, fixed_abs, tag = 'smem constant byte address 0x4 - core index']
  #allocation1 [shape = 'u32[144,128]{1,0:T(1,128)}', space=vmem, size = 0x12000, scoped, tag = 'internal scratch']
  #allocation2 [shape = 'f32[16,32]{1,0:T(8,128)}', space=vmem, size = 0x2000, scoped, tag = 'scratch operand']
  %s0 = inlined_call_operand.hbm [shape: f32[16,32], index: 0, kind: input, shape index: {}]
  %s1 = inlined_call_operand.hbm [shape: f32[32,256], index: 1, kind: input, shape index: {}]
  %s2 = inlined_call_operand.hbm [shape: f32[128,32], index: 2, kind: input, shape index: {}]
  %s3 = inlined_call_operand.hbm [shape: f32[16,32], index: 3, kind: output, shape index: {}]
  %s4 = sld [smem:[#allocation0]]
  $region46: #{tpu_custom_call.1} parent=0
    _
  %s6 = ssub.s32 1, %s4
  %s7 = scalar_select 0, %s6, %s4
  $region1: #{tpu_custom_call.1} parent=0
    #allocation3 [shape = 'u8[8192]{0}', space=vmem, size = 0x2000, scoped, tag = 'input window, operand 0, single buffered']
    #allocation4 [shape = 's32[1]{0}', space=sflag, size = 0x4, scoped, tag = 'scoped memory for tpu_custom_call.1']
    #allocation5 [shape = 's32[1]{0}', space=sflag, size = 0x4, scoped, tag = 'scoped memory for tpu_custom_call.1']
    #allocation6 [shape = 'u8[32768]{0}', space=vmem, size = 0x8000, scoped, tag = 'input window, operand 1, single buffered']
    #allocation7 [shape = 's32[1]{0}', space=sflag, size = 0x4, scoped, tag = 'scoped memory for tpu_custom_call.1']
    #allocation8 [shape = 'u8[65536]{0}', space=vmem, size = 0x10000, scoped, tag = 'input window, operand 2, single buffered']
    #allocation9 [shape = 'u8[8192]{0}', space=vmem, size = 0x2000, scoped, tag = 'output window, operand 0, single buffered']
    %8 = vsyncpa [#allocation4], 0
    %9 = vsyncpa [#allocation7], 0
    %10 = vsyncpa [#allocation5], 0
    // Predicated region
    $region2: #{tpu_custom_call.1} parent=1 // pred_check
      _
    $region3: #{tpu_custom_call.1} parent=1 // pred_check_branch
      %12 = sbr.rel (0) target = $region5
    $region4: #{tpu_custom_call.1} parent=1 // pred_region
      %s14 = ssub.s32 256, 256
      %15 = vsyncadd [#allocation4], %s14
      %s16 = sshll.u32 [#allocation3], 4
      %s17 = int_to_ptr.vmem [resolvable:$true] %s16
      %22 = dma.hbm_to_vmem [thread:$0]  %s0, 256, %s17, [#allocation4], 128, 128, 8
    $region5: #{tpu_custom_call.1} parent=1 // pred_fallthru
      _
    // Predicated region
    $region6: #{tpu_custom_call.1} parent=1 // pred_check
      _
    $region7: #{tpu_custom_call.1} parent=1 // pred_check_branch
      %24 = sbr.rel (0) target = $region9
    $region8: #{tpu_custom_call.1} parent=1 // pred_region
      %s26 = ssub.s32 1024, 1024
      %27 = vsyncadd [#allocation7], %s26
      %s28 = sshll.u32 [#allocation6], 4
      %s29 = int_to_ptr.vmem [resolvable:$true] %s28
      %34 = dma.hbm_to_vmem [thread:$0]  %s1, 1024, %s29, [#allocation7], 256, 256, 16
    $region9: #{tpu_custom_call.1} parent=1 // pred_fallthru
      _
    // Predicated region
    $region10: #{tpu_custom_call.1} parent=1 // pred_check
      _
    $region11: #{tpu_custom_call.1} parent=1 // pred_check_branch
      %36 = sbr.rel (0) target = $region13
    $region12: #{tpu_custom_call.1} parent=1 // pred_region
      %s38 = ssub.s32 2048, 2048
      %39 = vsyncadd [#allocation7], %s38
      %s40 = sshll.u32 [#allocation8], 4
      %s41 = int_to_ptr.vmem [resolvable:$true] %s40
      %46 = dma.hbm_to_vmem [thread:$0]  %s2, 2048, %s41, [#allocation7], 128, 128, 8
    $region13: #{tpu_custom_call.1} parent=1 // pred_fallthru
      _
    // Predicated region
    $region14: #{tpu_custom_call.1} parent=1 // pred_check
      _
    $region15: #{tpu_custom_call.1} parent=1 // pred_check_branch
      %48 = sbr.rel (0) target = $region17
    $region16: #{tpu_custom_call.1} parent=1 // pred_region
      %49 = dma.done [#allocation4], 256
    $region17: #{tpu_custom_call.1} parent=1 // pred_fallthru
      _
    // Predicated region
    $region18: #{tpu_custom_call.1} parent=1 // pred_check
      _
    $region19: #{tpu_custom_call.1} parent=1 // pred_check_branch
      %51 = sbr.rel (0) target = $region21
    $region20: #{tpu_custom_call.1} parent=1 // pred_region
      %52 = dma.done [#allocation7], 1024
    $region21: #{tpu_custom_call.1} parent=1 // pred_fallthru
      _
    // Predicated region
    $region22: #{tpu_custom_call.1} parent=1 // pred_check
      _
    $region23: #{tpu_custom_call.1} parent=1 // pred_check_branch
      %54 = sbr.rel (0) target = $region25
    $region24: #{tpu_custom_call.1} parent=1 // pred_region
      %55 = dma.done [#allocation7], 2048
    $region25: #{tpu_custom_call.1} parent=1 // pred_fallthru
      _
    %v56 = vld [vmem:[#allocation3] sm:$0xff]
    %v57 = vld [vmem:[#allocation3 + $0x8] sm:$0xff]
    %v58 = vld [vmem:[#allocation6] sm:$0xff]
    %v59 = vld [vmem:[#allocation6 + $0x8] sm:$0xff]
    %v60 = vld [vmem:[#allocation6 + $0x10] sm:$0xff]
    %v61 = vld [vmem:[#allocation6 + $0x18] sm:$0xff]
    %v62 = vld [vmem:[#allocation6 + $0x20] sm:$0xff]
    %v63 = vld [vmem:[#allocation6 + $0x28] sm:$0xff]
    %v64 = vld [vmem:[#allocation6 + $0x30] sm:$0xff]
    %v65 = vld [vmem:[#allocation6 + $0x38] sm:$0xff]
    %vm66 = vcmask 261120
    %v68 = vsel %vm66, %v56, 0
    %v71 = vsel %vm66, %v57, 0
    %73 = vmatprep.subr.mxu0 %v59
    %74 = vmatpush1.msra.mxu0 %v58
    %75 = vmatprep.subr.mxu0 %v61
    %76 = vmatpush1.msra.mxu0 %v60
    %77 = vmatprep.subr.mxu0 %v63
    %78 = vmatpush1.msra.mxu0 %v62
    %79 = vmatprep.subr.mxu0 %v65
    %80 = vmatpush1.msra.mxu0 %v64
    %81 = vmatprep.subr.mxu0 0.0
    %82 = vmatpush1.msra.mxu0 0.0
    %83 = vmatprep.subr.mxu0 0.0
    %84 = vmatpush1.msra.mxu0 0.0
    %85 = vmatprep.subr.mxu0 0.0
    %86 = vmatpush1.msra.mxu0 0.0
    %87 = vmatprep.subr.mxu0 0.0
    %88 = vmatpush1.msra.mxu0 0.0
    %89 = vmatprep.subr.mxu0 0.0
    %90 = vmatpush1.msra.mxu0 0.0
    %91 = vmatprep.subr.mxu0 0.0
    %92 = vmatpush1.msra.mxu0 0.0
    %93 = vmatprep.subr.mxu0 0.0
    %94 = vmatpush1.msra.mxu0 0.0
    %95 = vmatprep.subr.mxu0 0.0
    %96 = vmatpush1.msra.mxu0 0.0
    %97 = vmatprep.subr.mxu0 0.0
    %98 = vmatpush1.msra.mxu0 0.0
    %99 = vmatprep.subr.mxu0 0.0
    %100 = vmatpush1.msra.mxu0 0.0
    %101 = vmatprep.subr.mxu0 0.0
    %102 = vmatpush1.msra.mxu0 0.0
    %103 = vmatprep.subr.mxu0 0.0
    %104 = vmatpush1.msra.mxu0 0.0
    %105 = vmatprep.subr.mxu0 0.0
    %106 = vmatpush1.msra.mxu0 0.0
    %107 = vmatprep.subr.mxu0 0.0
    %108 = vmatpush1.msra.mxu0 0.0
    %109 = vmatprep.subr.mxu0 0.0
    %110 = vmatpush1.msra.mxu0 0.0
    %111 = vmatprep.subr.mxu0 0.0
    %112 = vmatpush1.msra.mxu0 0.0
    %113 = vmatprep.subr.mxu0 0.0
    %114 = vmatpush1.msra.mxu0 0.0
    %115 = vmatprep.subr.mxu0 0.0
    %116 = vmatpush1.msra.mxu0 0.0
    %117 = vmatprep.subr.mxu0 0.0
    %118 = vmatpush1.msra.mxu0 0.0
    %119 = vmatprep.subr.mxu0 0.0
    %120 = vmatpush1.msra.mxu0 0.0
    %121 = vmatprep.subr.mxu0 0.0
    %122 = vmatpush1.msra.mxu0 0.0
    %123 = vmatprep.subr.mxu0 0.0
    %124 = vmatpush1.msra.mxu0 0.0
    %125 = vmatprep.subr.mxu0 0.0
    %126 = vmatpush1.msra.mxu0 0.0
    %127 = vmatprep.subr.mxu0 0.0
    %128 = vmatpush1.msra.mxu0 0.0
    %129 = vmatprep.subr.mxu0 0.0
    %130 = vmatpush1.msra.mxu0 0.0
    %131 = vmatprep.subr.mxu0 0.0
    %132 = vmatpush1.msra.mxu0 0.0
    %133 = vmatprep.subr.mxu0 0.0
    %134 = vmatpush1.msra.mxu0 0.0
    %135 = vmatprep.subr.mxu0 0.0
    %136 = vmatpush1.msra.mxu0 0.0
    %137 = vmatprep.mubr.f32.mxu0 0.0
    %138 = vmatmul.mubr.f32.gmra.mrb[0].mxu0 %v68
    %v139 = vpop.f32.mrb[0].mxu0
    %v140 = vadd.f32 0.0, %v139
    %v141 = vpop.f32.mrb[0].mxu0
    %v142 = vadd.f32 0.0, %v141
    %143 = vmatprep.mubr.f32.mxu0 0.0
    %144 = vmatmul.mubr.f32.gmra.mrb[0].mxu0 %v71
    %v145 = vpop.f32.mrb[0].mxu0
    %v146 = vadd.f32 0.0, %v145
    %v147 = vpop.f32.mrb[0].mxu0
    %v148 = vadd.f32 0.0, %v147
    %149 = vdwg.mxu0
    %v150 = vxor.u32 %v140, 2147483648
    %v151 = vxor.u32 %v146, 2147483648
    %v152 = vmul.f32 %v150, 1.442695
    %v153 = vpow.pop %v152
    %v154 = vmul.f32 %v151, 1.442695
    %v155 = vpow.pop %v154
    %v156 = vadd.f32 %v153, 1.0
    %v157 = vadd.f32 %v155, 1.0
    %v158 = vrcp.pop %v156
    %v159 = vmul.f32 1.0, %v158
    %v160 = vrcp.pop %v157
    %v161 = vmul.f32 1.0, %v160
    %v162 = vmul.f32 %v140, %v159
    %v163 = vmul.f32 %v146, %v161
    %v164 = vmul.f32 %v162, %v142
    %v165 = vmul.f32 %v163, %v148
    %v166 = vld [vmem:[#allocation8] sm:$0xff]
    %v167 = vld [vmem:[#allocation8 + $0x8] sm:$0xff]
    %v168 = vld [vmem:[#allocation8 + $0x10] sm:$0xff]
    %v169 = vld [vmem:[#allocation8 + $0x18] sm:$0xff]
    %v170 = vld [vmem:[#allocation8 + $0x20] sm:$0xff]
    %v171 = vld [vmem:[#allocation8 + $0x28] sm:$0xff]
    %v172 = vld [vmem:[#allocation8 + $0x30] sm:$0xff]
    %v173 = vld [vmem:[#allocation8 + $0x38] sm:$0xff]
    %v174 = vld [vmem:[#allocation8 + $0x40] sm:$0xff]
    %v175 = vld [vmem:[#allocation8 + $0x48] sm:$0xff]
    %v176 = vld [vmem:[#allocation8 + $0x50] sm:$0xff]
    %v177 = vld [vmem:[#allocation8 + $0x58] sm:$0xff]
    %v178 = vld [vmem:[#allocation8 + $0x60] sm:$0xff]
    %v179 = vld [vmem:[#allocation8 + $0x68] sm:$0xff]
    %v180 = vld [vmem:[#allocation8 + $0x70] sm:$0xff]
    %v181 = vld [vmem:[#allocation8 + $0x78] sm:$0xff]
    %182 = vmatprep.subr.mxu0 0.0
    %183 = vmatpush1.msra.mxu0 %v166
    %184 = vmatprep.subr.mxu0 0.0
    %185 = vmatpush1.msra.mxu0 %v167
    %186 = vmatprep.subr.mxu0 0.0
    %187 = vmatpush1.msra.mxu0 %v168
    %188 = vmatprep.subr.mxu0 0.0
    %189 = vmatpush1.msra.mxu0 %v169
    %190 = vmatprep.subr.mxu0 0.0
    %191 = vmatpush1.msra.mxu0 %v170
    %192 = vmatprep.subr.mxu0 0.0
    %193 = vmatpush1.msra.mxu0 %v171
    %194 = vmatprep.subr.mxu0 0.0
    %195 = vmatpush1.msra.mxu0 %v172
    %196 = vmatprep.subr.mxu0 0.0
    %197 = vmatpush1.msra.mxu0 %v173
    %198 = vmatprep.subr.mxu0 0.0
    %199 = vmatpush1.msra.mxu0 %v174
    %200 = vmatprep.subr.mxu0 0.0
    %201 = vmatpush1.msra.mxu0 %v175
    %202 = vmatprep.subr.mxu0 0.0
    %203 = vmatpush1.msra.mxu0 %v176
    %204 = vmatprep.subr.mxu0 0.0
    %205 = vmatpush1.msra.mxu0 %v177
    %206 = vmatprep.subr.mxu0 0.0
    %207 = vmatpush1.msra.mxu0 %v178
    %208 = vmatprep.subr.mxu0 0.0
    %209 = vmatpush1.msra.mxu0 %v179
    %210 = vmatprep.subr.mxu0 0.0
    %211 = vmatpush1.msra.mxu0 %v180
    %212 = vmatprep.subr.mxu0 0.0
    %213 = vmatpush1.msra.mxu0 %v181
    %214 = vmatprep.subr.mxu0 0.0
    %215 = vmatpush1.msra.mxu0 0.0
    %216 = vmatprep.subr.mxu0 0.0
    %217 = vmatpush1.msra.mxu0 0.0
    %218 = vmatprep.subr.mxu0 0.0
    %219 = vmatpush1.msra.mxu0 0.0
    %220 = vmatprep.subr.mxu0 0.0
    %221 = vmatpush1.msra.mxu0 0.0
    %222 = vmatprep.subr.mxu0 0.0
    %223 = vmatpush1.msra.mxu0 0.0
    %224 = vmatprep.subr.mxu0 0.0
    %225 = vmatpush1.msra.mxu0 0.0
    %226 = vmatprep.subr.mxu0 0.0
    %227 = vmatpush1.msra.mxu0 0.0
    %228 = vmatprep.subr.mxu0 0.0
    %229 = vmatpush1.msra.mxu0 0.0
    %230 = vmatprep.subr.mxu0 0.0
    %231 = vmatpush1.msra.mxu0 0.0
    %232 = vmatprep.subr.mxu0 0.0
    %233 = vmatpush1.msra.mxu0 0.0
    %234 = vmatprep.subr.mxu0 0.0
    %235 = vmatpush1.msra.mxu0 0.0
    %236 = vmatprep.subr.mxu0 0.0
    %237 = vmatpush1.msra.mxu0 0.0
    %238 = vmatprep.subr.mxu0 0.0
    %239 = vmatpush1.msra.mxu0 0.0
    %240 = vmatprep.subr.mxu0 0.0
    %241 = vmatpush1.msra.mxu0 0.0
    %242 = vmatprep.subr.mxu0 0.0
    %243 = vmatpush1.msra.mxu0 0.0
    %244 = vmatprep.subr.mxu0 0.0
    %245 = vmatpush1.msra.mxu0 0.0
    %246 = vmatprep.mubr.f32.mxu0 0.0
    %247 = vmatmul.mubr.f32.gmra.mrb[0].mxu0 %v164
    %v248 = vpop.f32.mrb[0].mxu0
    %v249 = vadd.f32 0.0, %v248
    %v250 = vpop.f32.mrb[0].mxu0
    %251 = vmatprep.mubr.f32.mxu0 0.0
    %252 = vmatmul.mubr.f32.gmra.mrb[0].mxu0 %v165
    %v253 = vpop.f32.mrb[0].mxu0
    %v254 = vadd.f32 0.0, %v253
    %v255 = vpop.f32.mrb[0].mxu0
    %256 = vdwg.mxu0
    %p257 = scmp.eq.s32.totalorder 0, 0
    // Predicated region
    $region26: #{tpu_custom_call.1} parent=1 // pred_check
      %p258 = pneg %p257
    $region27: #{tpu_custom_call.1} parent=1 // pred_check_branch
      %260 = sbr.rel (%p258) target = $region29
    $region28: #{tpu_custom_call.1} parent=1 // pred_region
      %261 = vst.msk [vmem:[#allocation2] sm:$0xff] %vm66, %v249
      %262 = vst.msk [vmem:[#allocation2 + $0x8] sm:$0xff] %vm66, %v254
    $region29: #{tpu_custom_call.1} parent=1 // pred_fallthru
      _
    %p263 = scmp.gt.s32.totalorder 0, 0
    // Predicated region
    $region30: #{tpu_custom_call.1} parent=1 // pred_check
      %p264 = pneg %p263
    $region31: #{tpu_custom_call.1} parent=1 // pred_check_branch
      %266 = sbr.rel (%p264) target = $region33
    $region32: #{tpu_custom_call.1} parent=1 // pred_region
      %v267 = vld [vmem:[#allocation2] sm:$0xff]
      %v268 = vld [vmem:[#allocation2 + $0x8] sm:$0xff]
      %v269 = vadd.f32 %v267, %v249
      %v270 = vadd.f32 %v268, %v254
      %271 = vst.msk [vmem:[#allocation2] sm:$0xff] %vm66, %v269
      %272 = vst.msk [vmem:[#allocation2 + $0x8] sm:$0xff] %vm66, %v270
    $region33: #{tpu_custom_call.1} parent=1 // pred_fallthru
      _
    // Predicated region
    $region34: #{tpu_custom_call.1} parent=1 // pred_check
      %p273 = pneg %p257
    $region35: #{tpu_custom_call.1} parent=1 // pred_check_branch
      %275 = sbr.rel (%p273) target = $region37
    $region36: #{tpu_custom_call.1} parent=1 // pred_region
      %v276 = vld [vmem:[#allocation2] sm:$0xff]
      %v277 = vld [vmem:[#allocation2 + $0x8] sm:$0xff]
      %278 = vst.msk [vmem:[#allocation9] sm:$0xff] %vm66, %v276
      %279 = vst.msk [vmem:[#allocation9 + $0x8] sm:$0xff] %vm66, %v277
    $region37: #{tpu_custom_call.1} parent=1 // pred_fallthru
      _
    // Predicated region
    $region38: #{tpu_custom_call.1} parent=1 // pred_check
      _
    $region39: #{tpu_custom_call.1} parent=1 // pred_check_branch
      %281 = sbr.rel (0) target = $region41
    $region40: #{tpu_custom_call.1} parent=1 // pred_region
      %s283 = ssub.s32 256, 256
      %284 = vsyncadd [#allocation5], %s283
      %s285 = sshll.u32 [#allocation9], 4
      %s286 = int_to_ptr.vmem [resolvable:$true] %s285
      %291 = dma.vmem_to_hbm [thread:$0]  %s286, 256, %s3, [#allocation5], 128, 128, 8
    $region41: #{tpu_custom_call.1} parent=1 // pred_fallthru
      _
    // Predicated region
    $region42: #{tpu_custom_call.1} parent=1 // pred_check
      _
    $region43: #{tpu_custom_call.1} parent=1 // pred_check_branch
      %293 = sbr.rel (0) target = $region45
    $region44: #{tpu_custom_call.1} parent=1 // pred_region
      %294 = dma.done [#allocation5], 256
    $region45: #{tpu_custom_call.1} parent=1 // pred_fallthru
      _
    %295 = vsyncpa [#allocation4], 1
    %296 = vsyncpa [#allocation7], 1
    %297 = vsyncpa [#allocation5], 1

</llo_original>
